<compile_context>
chip_gen: v7x
topology: tpu7x:2x2x1
jax: 0.10.0
libtpu: 0.0.40
codegen_flags: <defaults>
</compile_context>

<pallas_src>
import functools

import jax
import jax.numpy as jnp
from jax.experimental import pallas as pl
from jax.experimental.pallas import tpu as pltpu

MARGIN = 0.8   # nn.Module __init__ default
SCALE = 1.0    # nn.Module __init__ default
EPS = 1e-8     # F.cosine_similarity eps default


def _round_up(x, m):
    return ((x + m - 1) // m) * m


def _sublane_multiple(itemsize):
    # f32 -> 8, bf16 -> 16, int8/fp8 -> 32 (minimum second-minor tile).
    return max(8, 32 // max(itemsize, 1))


def _detect_num_cores():
    """Best-effort TensorCore-per-chip count (2 on v7x). Defaults to 1."""
    try:
        info = pltpu.get_tpu_info()
    except Exception:
        return 1
    for attr in ("num_cores", "num_tensorcores", "tensorcores_per_chip",
                 "cores_per_chip", "core_count"):
        v = getattr(info, attr, None)
        if isinstance(v, int) and 1 <= v <= 8:
            return min(v, 2)
    return 1


def _pick_batch_tile(batch, dim, itemsize,
                     budget_bytes=20 * 1024 * 1024,
                     max_block_bytes=4 * 1024 * 1024):
    """Largest row tile whose true VMEM footprint (including the 128-lane
    padding of the (tb,1) target block, the lane-padded accumulator scratch
    and double-buffered inputs) fits a conservative budget, with each input
    block kept in the multi-MiB range to amortize per-step overhead."""
    sublane = _sublane_multiple(itemsize)
    d_pad = _round_up(dim, 128)                       # lane padding in VMEM
    per_row = (2 * 2 * d_pad * itemsize               # 2 inputs x 2 buffers
               + 2 * 128 * 4                          # target block (lane-padded) x 2
               + 128 * 4)                             # (tb,1) f32 acc scratch
    tb = budget_bytes // max(per_row, 1)
    # Bytes-per-step target: each input block around a few MiB (not a fixed
    # row cap) -- e.g. up to 8192 rows when D <= 128.
    tb = min(tb, max(max_block_bytes // max(d_pad * itemsize, 1), sublane))
    tb = max((tb // sublane) * sublane, sublane)
    return min(tb, _round_up(batch, sublane))


def _contrastive_loss_kernel(x1_ref, x2_ref, t_ref, o_ref, acc_ref, *,
                             margin, batch, block_rows, tiles_per_core,
                             needs_mask, first_masked_tile):
    i = pl.program_id(1)                               # reduction axis (per core)

    @pl.when(i == 0)
    def _():
        acc_ref[...] = jnp.zeros_like(acc_ref)

    x1 = x1_ref[...].astype(jnp.float32)               # (TB, D)
    x2 = x2_ref[...].astype(jnp.float32)               # (TB, D)
    t = t_ref[...].astype(jnp.float32)                 # (TB, 1)

    # Cosine similarity along the feature (lane) axis -- VPU multiplies + lane
    # reduce, no MXU. Clamp the squared-norm *product* (PyTorch semantics) and
    # take a single EUP rsqrt.
    dot = jnp.sum(x1 * x2, axis=-1, keepdims=True)     # (TB, 1)
    sq1 = jnp.sum(x1 * x1, axis=-1, keepdims=True)
    sq2 = jnp.sum(x2 * x2, axis=-1, keepdims=True)
    inv = jax.lax.rsqrt(jnp.maximum(sq1 * sq2, EPS * EPS))
    cos = dot * inv

    distance = 1.0 - cos
    hinge = jnp.maximum(margin - distance, 0.0)
    per_row = (1.0 - t) * distance * distance + t * hinge * hinge   # (TB, 1)

    if not needs_mask:
        # No partial / duplicate tiles anywhere in the grid: pure VPU add.
        acc_ref[...] += per_row
    else:
        tile = pl.program_id(0) * tiles_per_core + i   # flat (logical) tile id

        @pl.when(tile < first_masked_tile)
        def _():
            acc_ref[...] += per_row

        @pl.when(tile >= first_masked_tile)
        def _():
            # Partial last tile and/or clamped duplicate tiles: mask rows >= B.
            row = tile * block_rows + jax.lax.broadcasted_iota(
                jnp.int32, per_row.shape, 0)
            acc_ref[...] += jnp.where(row < batch, per_row, 0.0)

    @pl.when(i == pl.num_programs(1) - 1)
    def _():
        # Single cross-sublane reduce per core; broadcast into the dense
        # (1, 8, 128) per-core output block (unmasked store).
        s = jnp.sum(acc_ref[...], keepdims=True)       # (1, 1)
        o_ref[...] = jnp.broadcast_to(s.reshape(1, 1, 1), o_ref.shape)


def contrastive_loss(output1, output2, target, *, margin=MARGIN, scale=SCALE,
                     block_rows=None, num_cores=None):
    """output1, output2: (B, D); target: (B,). Returns a scalar f32 loss.

    Inputs may be f32 or bf16; accumulation is always f32 in-kernel.
    """
    B, D = output1.shape
    t2d = target.reshape(B, 1).astype(jnp.float32)

    itemsize = max(jnp.dtype(output1.dtype).itemsize,
                   jnp.dtype(output2.dtype).itemsize)
    sublane = _sublane_multiple(itemsize)

    tb = block_rows if block_rows is not None else _pick_batch_tile(B, D, itemsize)
    tb = min(tb, _round_up(B, sublane))

    if num_cores is None:
        num_cores = _detect_num_cores()
    num_tiles = pl.cdiv(B, tb)
    num_cores_used = max(1, min(int(num_cores), num_tiles))
    tiles_per_core = pl.cdiv(num_tiles, num_cores_used)
    total_tiles = num_cores_used * tiles_per_core

    needs_mask = (total_tiles * tb != B)               # any partial/dup tile?
    first_masked_tile = B // tb                        # first tile needing mask

    # Flat row-block index; clamp only if the grid over-covers (duplicate
    # tiles are fully masked in-kernel and re-use the last block's DMA).
    if total_tiles > num_tiles:
        def row_block(c, i):
            return jnp.minimum(c * tiles_per_core + i, num_tiles - 1)
    else:
        def row_block(c, i):
            return c * tiles_per_core + i

    # Real VMEM footprint (lane-padded) + headroom -> explicit limit, so we do
    # not depend on the 16/32 MiB scoped defaults (v5e is the tight one).
    d_pad = _round_up(D, 128)
    vmem_need = (2 * 2 * tb * d_pad * itemsize         # inputs, double-buffered
                 + 2 * tb * 128 * 4                    # target block (lane-padded)
                 + tb * 128 * 4                        # accumulator scratch
                 + 2 * 8 * 128 * 4)                    # output block
    vmem_limit = int(vmem_need + (8 << 20))

    kernel = functools.partial(
        _contrastive_loss_kernel,
        margin=float(margin), batch=B, block_rows=tb,
        tiles_per_core=tiles_per_core,
        needs_mask=needs_mask, first_masked_tile=first_masked_tile,
    )

    out = pl.pallas_call(
        kernel,
        out_shape=jax.ShapeDtypeStruct((num_cores_used, 8, 128), jnp.float32),
        grid=(num_cores_used, tiles_per_core),
        in_specs=[
            pl.BlockSpec((tb, D), lambda c, i: (row_block(c, i), 0)),
            pl.BlockSpec((tb, D), lambda c, i: (row_block(c, i), 0)),
            pl.BlockSpec((tb, 1), lambda c, i: (row_block(c, i), 0)),
        ],
        out_specs=pl.BlockSpec((1, 8, 128), lambda c, i: (c, 0, 0)),
        scratch_shapes=[pltpu.VMEM((tb, 1), jnp.float32)],
        compiler_params=pltpu.CompilerParams(
            dimension_semantics=("parallel", "arbitrary"),
            vmem_limit_bytes=vmem_limit,
        ),
    )(output1, output2, t2d)

    # Tiny cross-core reduction + mean/scale in the wrapper.
    return (scale / B) * jnp.sum(out[:, 0, 0])


def _reference_loss(output1, output2, target, margin=MARGIN, scale=SCALE):
    x1 = output1.astype(jnp.float32)
    x2 = output2.astype(jnp.float32)
    t = target.astype(jnp.float32)
    dot = jnp.sum(x1 * x2, axis=1)
    sq1 = jnp.sum(x1 * x1, axis=1)
    sq2 = jnp.sum(x2 * x2, axis=1)
    # PyTorch F.cosine_similarity: clamp the squared-norm product with eps^2.
    cos = dot / jnp.sqrt(jnp.maximum(sq1 * sq2, EPS * EPS))
    d = 1.0 - cos
    loss = jnp.mean((1.0 - t) * d ** 2 + t * jnp.maximum(margin - d, 0.0) ** 2)
    return scale * loss


if __name__ == "__main__":
    key = jax.random.PRNGKey(0)
    ks = jax.random.split(key, 9)

    # Case 1: small shape consistent with the module (single-tile path, f32).
    B, D = 8, 32
    o1 = jax.random.normal(ks[0], (B, D), dtype=jnp.float32)
    o2 = jax.random.normal(ks[1], (B, D), dtype=jnp.float32)
    tgt = jax.random.bernoulli(ks[2], 0.5, (B,)).astype(jnp.float32)
    loss = contrastive_loss(o1, o2, tgt)
    jax.block_until_ready(loss)
    ref = _reference_loss(o1, o2, tgt)
    assert jnp.allclose(loss, ref, atol=1e-5, rtol=1e-5), (loss, ref)

    # Case 2: multi-tile reduction grid with a partial (masked) last tile.
    B2, D2 = 20, 128
    o1b = jax.random.normal(ks[3], (B2, D2), dtype=jnp.float32)
    o2b = jax.random.normal(ks[4], (B2, D2), dtype=jnp.float32)
    tgtb = jax.random.bernoulli(ks[5], 0.5, (B2,)).astype(jnp.float32)
    loss2 = contrastive_loss(o1b, o2b, tgtb, block_rows=8)
    jax.block_until_ready(loss2)
    ref2 = _reference_loss(o1b, o2b, tgtb)
    assert jnp.allclose(loss2, ref2, atol=1e-5, rtol=1e-5), (loss2, ref2)

    # Case 3: force the 2-core layout (per-core partial sums, clamped duplicate
    # tile, masked partial tile). Correct on single-TC parts too (the parallel
    # axis simply serializes).
    loss3 = contrastive_loss(o1b, o2b, tgtb, block_rows=8, num_cores=2)
    jax.block_until_ready(loss3)
    assert jnp.allclose(loss3, ref2, atol=1e-5, rtol=1e-5), (loss3, ref2)

    # Case 4: bf16 inputs (16-row sublane tiles, f32 in-kernel accumulation).
    B3, D3 = 48, 256
    o1c = jax.random.normal(ks[6], (B3, D3), dtype=jnp.bfloat16)
    o2c = jax.random.normal(ks[7], (B3, D3), dtype=jnp.bfloat16)
    tgtc = jax.random.bernoulli(ks[8], 0.5, (B3,)).astype(jnp.float32)
    loss4 = contrastive_loss(o1c, o2c, tgtc)
    jax.block_until_ready(loss4)
    ref4 = _reference_loss(o1c, o2c, tgtc)
    assert jnp.allclose(loss4, ref4, atol=1e-5, rtol=1e-5), (loss4, ref4)

    print("KERNEL_OK")
</pallas_src>

<mosaic_0001>
module attributes {stable_mosaic.version = 11 : i64} {
  func.func @_contrastive_loss_kernel(%arg0: i32, %arg1: i32, %arg2: memref<8x32xf32, #tpu.memory_space<vmem>>, %arg3: memref<8x32xf32, #tpu.memory_space<vmem>>, %arg4: memref<8x1xf32, #tpu.memory_space<vmem>>, %arg5: memref<1x8x128xf32, #tpu.memory_space<vmem>>, %arg6: memref<8x1xf32, #tpu.memory_space<vmem>>) attributes {dimension_semantics = [#tpu.dimension_semantics<parallel>, #tpu.dimension_semantics<arbitrary>], iteration_bounds = array<i64: 1, 1>, scalar_prefetch = 0 : i64, scratch_operands = 1 : i64, tpu.core_type = #tpu.core_type<tc>, window_params = [{transform_indices = @transform_0, window_bounds = array<i64: 8, 32>}, {transform_indices = @transform_1, window_bounds = array<i64: 8, 32>}, {transform_indices = @transform_2, window_bounds = array<i64: 8, 1>}, {transform_indices = @transform_3, window_bounds = array<i64: 1, 8, 128>}]} {
    %c0_i32 = arith.constant 0 : i32
    %0 = arith.cmpi eq, %arg1, %c0_i32 : i32
    %1 = arith.extui %0 : i1 to i32
    %c0_i32_0 = arith.constant 0 : i32
    %2 = arith.cmpi ne, %1, %c0_i32_0 : i32
    scf.if %2 {
      %cst_19 = arith.constant 0.000000e+00 : f32
      %39 = vector.broadcast %cst_19 : f32 to vector<8x1xf32>
      %c0_20 = arith.constant 0 : index
      %c0_21 = arith.constant 0 : index
      %40 = vector.load %arg6[%c0_20, %c0_21] : memref<8x1xf32, #tpu.memory_space<vmem>>, vector<8x1xf32>
      tpu.vector_store %arg6[%c0_20, %c0_21], %39 {strides = array<i32>} : memref<8x1xf32, #tpu.memory_space<vmem>>, vector<8x1xf32>,
    } else {
    }
    %c0 = arith.constant 0 : index
    %c0_1 = arith.constant 0 : index
    %3 = vector.load %arg2[%c0, %c0_1] : memref<8x32xf32, #tpu.memory_space<vmem>>, vector<8x32xf32>
    %c0_2 = arith.constant 0 : index
    %c0_3 = arith.constant 0 : index
    %4 = vector.load %arg3[%c0_2, %c0_3] : memref<8x32xf32, #tpu.memory_space<vmem>>, vector<8x32xf32>
    %c0_4 = arith.constant 0 : index
    %c0_5 = arith.constant 0 : index
    %5 = vector.load %arg4[%c0_4, %c0_5] : memref<8x1xf32, #tpu.memory_space<vmem>>, vector<8x1xf32>
    %6 = arith.mulf %3, %4 : vector<8x32xf32>
    %cst = arith.constant dense<0.000000e+00> : vector<8xf32>
    %7 = vector.multi_reduction <add>, %6, %cst [1] : vector<8x32xf32> to vector<8xf32>
    %8 = vector.shape_cast %7 : vector<8xf32> to vector<8x1xf32>
    %9 = arith.mulf %3, %3 : vector<8x32xf32>
    %cst_6 = arith.constant dense<0.000000e+00> : vector<8xf32>
    %10 = vector.multi_reduction <add>, %9, %cst_6 [1] : vector<8x32xf32> to vector<8xf32>
    %11 = vector.shape_cast %10 : vector<8xf32> to vector<8x1xf32>
    %12 = arith.mulf %4, %4 : vector<8x32xf32>
    %cst_7 = arith.constant dense<0.000000e+00> : vector<8xf32>
    %13 = vector.multi_reduction <add>, %12, %cst_7 [1] : vector<8x32xf32> to vector<8xf32>
    %14 = vector.shape_cast %13 : vector<8xf32> to vector<8x1xf32>
    %15 = arith.mulf %11, %14 : vector<8x1xf32>
    %cst_8 = arith.constant 1.000000e-16 : f32
    %16 = vector.broadcast %cst_8 : f32 to vector<8x1xf32>
    %17 = arith.maximumf %15, %16 : vector<8x1xf32>
    %18 = math.rsqrt %17 : vector<8x1xf32>
    %19 = arith.mulf %8, %18 : vector<8x1xf32>
    %cst_9 = arith.constant 1.000000e+00 : f32
    %20 = vector.broadcast %cst_9 : f32 to vector<8x1xf32>
    %21 = arith.subf %20, %19 : vector<8x1xf32>
    %cst_10 = arith.constant 8.000000e-01 : f32
    %22 = vector.broadcast %cst_10 : f32 to vector<8x1xf32>
    %23 = arith.subf %22, %21 : vector<8x1xf32>
    %cst_11 = arith.constant 0.000000e+00 : f32
    %24 = vector.broadcast %cst_11 : f32 to vector<8x1xf32>
    %25 = arith.maximumf %23, %24 : vector<8x1xf32>
    %cst_12 = arith.constant 1.000000e+00 : f32
    %26 = vector.broadcast %cst_12 : f32 to vector<8x1xf32>
    %27 = arith.subf %26, %5 : vector<8x1xf32>
    %28 = arith.mulf %27, %21 : vector<8x1xf32>
    %29 = arith.mulf %28, %21 : vector<8x1xf32>
    %30 = arith.mulf %5, %25 : vector<8x1xf32>
    %31 = arith.mulf %30, %25 : vector<8x1xf32>
    %32 = arith.addf %29, %31 : vector<8x1xf32>
    %c0_13 = arith.constant 0 : index
    %c0_14 = arith.constant 0 : index
    %33 = vector.load %arg6[%c0_13, %c0_14] : memref<8x1xf32, #tpu.memory_space<vmem>>, vector<8x1xf32>
    %34 = arith.addf %33, %32 : vector<8x1xf32>
    %c0_15 = arith.constant 0 : index
    %c0_16 = arith.constant 0 : index
    %35 = vector.load %arg6[%c0_15, %c0_16] : memref<8x1xf32, #tpu.memory_space<vmem>>, vector<8x1xf32>
    tpu.vector_store %arg6[%c0_15, %c0_16], %34 {strides = array<i32>} : memref<8x1xf32, #tpu.memory_space<vmem>>, vector<8x1xf32>,
    %c0_i32_17 = arith.constant 0 : i32
    %36 = arith.cmpi eq, %arg1, %c0_i32_17 : i32
    %37 = arith.extui %36 : i1 to i32
    %c0_i32_18 = arith.constant 0 : i32
    %38 = arith.cmpi ne, %37, %c0_i32_18 : i32
    scf.if %38 {
      %c0_19 = arith.constant 0 : index
      %c0_20 = arith.constant 0 : index
      %39 = vector.load %arg6[%c0_19, %c0_20] : memref<8x1xf32, #tpu.memory_space<vmem>>, vector<8x1xf32>
      %40 = vector.shape_cast %39 : vector<8x1xf32> to vector<1x8x1xf32>
      %cst_21 = arith.constant dense<0.000000e+00> : vector<1xf32>
      %41 = vector.multi_reduction <add>, %40, %cst_21 [1, 2] : vector<1x8x1xf32> to vector<1xf32>
      %42 = vector.shape_cast %41 : vector<1xf32> to vector<1x1x1xf32>
      %43 = vector.extract %42[0, 0, 0] : f32 from vector<1x1x1xf32>
      %44 = vector.broadcast %43 : f32 to vector<1x1xf32>
      %45 = vector.shape_cast %44 : vector<1x1xf32> to vector<1x1x1xf32>
      %46 = vector.shape_cast %45 : vector<1x1x1xf32> to vector<1x1x1xf32>
      %47 = vector.broadcast %46 : vector<1x1x1xf32> to vector<1x8x128xf32>
      %c0_22 = arith.constant 0 : index
      %c0_23 = arith.constant 0 : index
      %c0_24 = arith.constant 0 : index
      %48 = vector.load %arg5[%c0_22, %c0_23, %c0_24] : memref<1x8x128xf32, #tpu.memory_space<vmem>>, vector<1x8x128xf32>
      tpu.vector_store %arg5[%c0_22, %c0_23, %c0_24], %47 {strides = array<i32>} : memref<1x8x128xf32, #tpu.memory_space<vmem>>, vector<1x8x128xf32>,
    } else {
    }
    return
  }
  func.func @transform_0(%arg0: i32, %arg1: i32) -> (i32, i32) {
    %c1_i32 = arith.constant 1 : i32
    %0 = arith.muli %arg0, %c1_i32 : i32
    %1 = arith.addi %0, %arg1 : i32
    %c0_i32 = arith.constant 0 : i32
    %c0_i32_0 = arith.constant 0 : i32
    return %1, %c0_i32 : i32, i32
  }
  func.func @transform_1(%arg0: i32, %arg1: i32) -> (i32, i32) {
    %c1_i32 = arith.constant 1 : i32
    %0 = arith.muli %arg0, %c1_i32 : i32
    %1 = arith.addi %0, %arg1 : i32
    %c0_i32 = arith.constant 0 : i32
    %c0_i32_0 = arith.constant 0 : i32
    return %1, %c0_i32 : i32, i32
  }
  func.func @transform_2(%arg0: i32, %arg1: i32) -> (i32, i32) {
    %c1_i32 = arith.constant 1 : i32
    %0 = arith.muli %arg0, %c1_i32 : i32
    %1 = arith.addi %0, %arg1 : i32
    %c0_i32 = arith.constant 0 : i32
    %c0_i32_0 = arith.constant 0 : i32
    return %1, %c0_i32 : i32, i32
  }
  func.func @transform_3(%arg0: i32, %arg1: i32) -> (i32, i32, i32) {
    %c0_i32 = arith.constant 0 : i32
    %c0_i32_0 = arith.constant 0 : i32
    %c0_i32_1 = arith.constant 0 : i32
    return %arg0, %c0_i32, %c0_i32_0 : i32, i32, i32
  }
}

</mosaic_0001>

<llo_original>
// kernel: tpu_custom_call.1
$region0: #{tpu_custom_call.1}
  #allocation0 [shape = 'u32[]', space=smem, size = 0x4, offset = 0x4, fixed_abs, tag = 'smem constant byte address 0x4 - core index']
  #allocation1 [shape = 'u32[144,128]{1,0:T(1,128)}', space=vmem, size = 0x12000, scoped, tag = 'internal scratch']
  #allocation2 [shape = 'f32[8,1]{1,0:T(8,128)}', space=vmem, size = 0x1000, scoped, tag = 'scratch operand']
  %s0 = inlined_call_operand.vmem [shape: f32[8,32], index: 0, kind: input, shape index: {}]
  %s1 = inlined_call_operand.hbm [shape: f32[8,32], index: 1, kind: input, shape index: {}]
  %s2 = inlined_call_operand.vmem [shape: f32[8,1], index: 2, kind: input, shape index: {}]
  %s3 = inlined_call_operand.hbm [shape: f32[1,8,128], index: 3, kind: output, shape index: {}]
  %s4 = sld [smem:[#allocation0]]
  $region34: #{tpu_custom_call.1} parent=0
    _
  %s6 = ssub.s32 1, %s4
  %s7 = scalar_select 0, %s6, %s4
  $region1: #{tpu_custom_call.1} parent=0
    #allocation3 [shape = 'u8[4096]{0}', space=vmem, size = 0x1000, scoped, tag = 'input window, operand 1, single buffered']
    #allocation4 [shape = 's32[1]{0}', space=sflag, size = 0x4, scoped, tag = 'scoped memory for tpu_custom_call.1']
    #allocation5 [shape = 's32[1]{0}', space=sflag, size = 0x4, scoped, tag = 'scoped memory for tpu_custom_call.1']
    #allocation6 [shape = 'u8[4096]{0}', space=vmem, size = 0x1000, scoped, tag = 'output window, operand 0, single buffered']
    %8 = vsyncpa [#allocation4], 0
    %9 = vsyncpa [#allocation5], 0
    // Predicated region
    $region2: #{tpu_custom_call.1} parent=1 // pred_check
      _
    $region3: #{tpu_custom_call.1} parent=1 // pred_check_branch
      %11 = sbr.rel (0) target = $region5
    $region4: #{tpu_custom_call.1} parent=1 // pred_region
      %s12 = sadd.s32 0, 0
      %p13 = scmp.lt.s32.totalorder %s12, 0
      %s14 = scalar_select %p13, %s12, 0
      %s15 = smul.addr %s14, 8
      %s16 = scalar_lea.vmem %s0, %s15
      %s17 = sadd.s32 0, 0
    $region5: #{tpu_custom_call.1} parent=1 // pred_fallthru
      _
    // Predicated region
    $region6: #{tpu_custom_call.1} parent=1 // pred_check
      _
    $region7: #{tpu_custom_call.1} parent=1 // pred_check_branch
      %19 = sbr.rel (0) target = $region9
    $region8: #{tpu_custom_call.1} parent=1 // pred_region
      %s20 = sadd.s32 0, 0
      %s22 = ssub.s32 128, 128
      %23 = vsyncadd [#allocation4], %s22
      %s24 = smul.addr %s20, 128
      %s25 = scalar_lea.hbm %s1, %s24
      %s27 = sshll.u32 [#allocation3], 4
      %s28 = int_to_ptr.vmem [resolvable:$true] %s27
      %30 = dma.hbm_to_vmem [thread:$0]  %s25, 128, %s28, [#allocation4]
    $region9: #{tpu_custom_call.1} parent=1 // pred_fallthru
      _
    // Predicated region
    $region10: #{tpu_custom_call.1} parent=1 // pred_check
      _
    $region11: #{tpu_custom_call.1} parent=1 // pred_check_branch
      %32 = sbr.rel (0) target = $region13
    $region12: #{tpu_custom_call.1} parent=1 // pred_region
      %s33 = sadd.s32 0, 0
      %p34 = scmp.lt.s32.totalorder %s33, 0
      %s35 = scalar_select %p34, %s33, 0
      %s36 = smul.addr %s35, 8
      %s37 = scalar_lea.vmem %s2, %s36
      %s38 = sadd.s32 0, 0
    $region13: #{tpu_custom_call.1} parent=1 // pred_fallthru
      _
    // Predicated region
    $region14: #{tpu_custom_call.1} parent=1 // pred_check
      _
    $region15: #{tpu_custom_call.1} parent=1 // pred_check_branch
      %40 = sbr.rel (0) target = $region17
    $region16: #{tpu_custom_call.1} parent=1 // pred_region
      %41 = dma.done [#allocation4], 128
    $region17: #{tpu_custom_call.1} parent=1 // pred_fallthru
      _
    %s42 = sadd.s32 0, 0
    %p43 = scmp.lt.s32.totalorder %s42, 0
    %s44 = scalar_select %p43, %s42, 0
    %s45 = smul.addr %s44, 8
    %s46 = scalar_lea.vmem %s0, %s45
    %s47 = sadd.s32 0, 0
    %p48 = scmp.lt.s32.totalorder %s47, 0
    %s49 = scalar_select %p48, %s47, 0
    %s50 = smul.addr %s49, 8
    %s51 = scalar_lea.vmem %s2, %s50
    %s52 = sadd.s32 0, 0
    %p53 = scmp.lt.s32.totalorder %s52, 0
    %s54 = scalar_select %p53, %s52, 0
    %s55 = smul.addr %s54, 8
    %s56 = scalar_lea.vmem %s0, %s55
    %s57 = sadd.s32 0, 0
    %s58 = sadd.s32 0, 0
    %s59 = sadd.s32 0, 0
    %p60 = scmp.lt.s32.totalorder %s59, 0
    %s61 = scalar_select %p60, %s59, 0
    %s62 = smul.addr %s61, 8
    %s63 = scalar_lea.vmem %s2, %s62
    %s64 = sadd.s32 0, 0
    %p65 = scmp.eq.s32.totalorder 0, 0
    // Predicated region
    $region18: #{tpu_custom_call.1} parent=1 // pred_check
      %p66 = pneg %p65
    $region19: #{tpu_custom_call.1} parent=1 // pred_check_branch
      %68 = sbr.rel (%p66) target = $region21
    $region20: #{tpu_custom_call.1} parent=1 // pred_region
      %vm69 = vcmask 7168
      %70 = vst.msk [vmem:[#allocation2] sm:$0xff] %vm69, 0.0
    $region21: #{tpu_custom_call.1} parent=1 // pred_fallthru
      _
    %v71 = vld [vmem:[%s56] sm:$0xff]
    %v72 = vld [vmem:[#allocation3] sm:$0xff]
    %v73 = vld [vmem:[%s63] sm:$0xff]
    %v74 = vmul.f32 %v71, %v72
    %vm75 = vcmask 261120
    %v76 = vsel %vm75, %v74, 0.0
    %77 = vadd.xlane.f32.xlu0 %v76
    %v78 = vpop.xlane.xlu0 %77
    %v79 = vmul.f32 %v71, %v71
    %v80 = vsel %vm75, %v79, 0.0
    %81 = vadd.xlane.f32.xlu0 %v80
    %v82 = vpop.xlane.xlu0 %81
    %v83 = vmul.f32 %v72, %v72
    %v84 = vsel %vm75, %v83, 0.0
    %85 = vadd.xlane.f32.xlu0 %v84
    %v86 = vpop.xlane.xlu0 %85
    %v87 = vmul.f32 %v82, %v86
    %v88 = vmax.f32 %v87, 1e-16
    %v89 = vrsqrt.pop %v88
    %v90 = vmul.f32 %v78, %v89
    %v91 = vsub.f32 1.0, %v90
    %v92 = vsub.f32 0.8, %v91
    %v93 = vmax.f32 %v92, 0.0
    %v94 = vsub.f32 1.0, %v73
    %v95 = vmul.f32 %v94, %v91
    %v96 = vmul.f32 %v95, %v91
    %v97 = vmul.f32 %v73, %v93
    %v98 = vmul.f32 %v97, %v93
    %v99 = vadd.f32 %v96, %v98
    %v100 = vld [vmem:[#allocation2] sm:$0xff]
    %v101 = vadd.f32 %v100, %v99
    %vm102 = vcmask 7168
    %103 = vst.msk [vmem:[#allocation2] sm:$0xff] %vm102, %v101
    // Predicated region
    $region22: #{tpu_custom_call.1} parent=1 // pred_check
      %p104 = pneg %p65
    $region23: #{tpu_custom_call.1} parent=1 // pred_check_branch
      %106 = sbr.rel (%p104) target = $region25
    $region24: #{tpu_custom_call.1} parent=1 // pred_region
      %v107 = vld [vmem:[#allocation2] sm:$0xff]
      %v108 = vsel %vm102, %v107, 0.0
      %109 = vadd.xlane.f32.xlu0 %v108
      %v110 = vpop.xlane.xlu0 %109
      %v111 = vrot.slane %v110, 4
      %v112 = vadd.f32 %v110, %v111
      %v113 = vrot.slane %v112, 2
      %v114 = vadd.f32 %v112, %v113
      %v115 = vrot.slane %v114, 1
      %v116 = vadd.f32 %v114, %v115
      %s117 = vtos %v116
      %v118 = vstv %s117
      %119 = vst [vmem:[#allocation6] sm:$0xff] %v118
    $region25: #{tpu_custom_call.1} parent=1 // pred_fallthru
      _
    // Predicated region
    $region26: #{tpu_custom_call.1} parent=1 // pred_check
      _
    $region27: #{tpu_custom_call.1} parent=1 // pred_check_branch
      %121 = sbr.rel (0) target = $region29
    $region28: #{tpu_custom_call.1} parent=1 // pred_region
      %s123 = ssub.s32 128, 128
      %124 = vsyncadd [#allocation5], %s123
      %s126 = sshll.u32 [#allocation6], 4
      %s127 = int_to_ptr.vmem [resolvable:$true] %s126
      %129 = dma.vmem_to_hbm [thread:$0]  %s127, 128, %s3, [#allocation5]
    $region29: #{tpu_custom_call.1} parent=1 // pred_fallthru
      _
    // Predicated region
    $region30: #{tpu_custom_call.1} parent=1 // pred_check
      _
    $region31: #{tpu_custom_call.1} parent=1 // pred_check_branch
      %131 = sbr.rel (0) target = $region33
    $region32: #{tpu_custom_call.1} parent=1 // pred_region
      %132 = dma.done [#allocation5], 128
    $region33: #{tpu_custom_call.1} parent=1 // pred_fallthru
      _
    %133 = vsyncpa [#allocation4], 1
    %134 = vsyncpa [#allocation5], 1

</llo_original>
